<compile_context>
chip_gen: v6e
topology: v6e:2x2x1
jax: 0.10.0
libtpu: 0.0.40
codegen_flags: <defaults>
</compile_context>

<pallas_src>
import functools

import jax
import jax.numpy as jnp
from jax.experimental import pallas as pl
from jax.experimental.pallas import tpu as pltpu


def _round_up(x, m):
    return (x + m - 1) // m * m


# ----------------------------------------------------------------------------
# Pallas kernel: fused  (BN-folded) fc -> relu -> output linear, transposed layout
# ----------------------------------------------------------------------------
def _fcnet_kernel(xT_ref, w1T_ref, b1_ref, w2T_ref, b2_ref, oT_ref, *, precision):
    # xT:  [Dp, TB] (matmul dtype)     w1T: [Hp, Dp] (matmul dtype, BN folded)
    # b1:  [Hp, 1]  (f32, BN folded)   w2T: [Op, Hp] (matmul dtype)
    # b2:  [Op, 1]  (f32)              oT:  [Op, TB] (bf16 perf path / f32 check path)
    h = jnp.dot(w1T_ref[...], xT_ref[...],
                preferred_element_type=jnp.float32, precision=precision)   # [Hp, TB]
    h = jnp.maximum(h + b1_ref[...], 0.0)         # bias + ReLU in f32 (v5e-safe VPU)
    h = h.astype(w2T_ref.dtype)                   # back to matmul dtype for the MXU
    out = jnp.dot(w2T_ref[...], h,
                  preferred_element_type=jnp.float32, precision=precision)  # [Op, TB]
    oT_ref[...] = (out + b2_ref[...]).astype(oT_ref.dtype)


# ----------------------------------------------------------------------------
# VMEM budget & batch-tile sizing
# ----------------------------------------------------------------------------
def _vmem_budget():
    """Half of this generation's VMEM (v7x=64MiB, v5e/v6e=128MiB), capped for safety."""
    try:
        info = pltpu.get_tpu_info()
        vmem = int(getattr(info, "vmem_capacity_bytes", 64 << 20))
    except Exception:  # no hardware info available -> assume the smallest (v7x)
        vmem = 64 << 20
    return int(min(max(16 << 20, vmem // 2), 96 << 20))


def _pick_batch_tile(dp, hp, op, mm_bytes, out_bytes, budget):
    """Largest lane (=batch) tile that fits the VMEM budget, incl. intermediates."""
    # Grid-invariant blocks: count at 2x (not explicitly single-buffered).
    resident = 2 * ((dp * hp + hp * op) * mm_bytes + (hp + op) * 4)
    # Per batch column:
    per_col = (2 * dp * mm_bytes          # xT block, double-buffered
               + 2 * op * out_bytes       # output block, double-buffered
               + hp * (4 + mm_bytes)      # [Hp,TB] f32 intermediate + matmul-dtype copy
               + op * 4)                  # second-matmul f32 accumulator
    tb = (budget - resident) // max(per_col, 1)
    tb = int(max(128, min(2048, (tb // 128) * 128)))   # lane-dim tile: multiple of 128
    return tb


# ----------------------------------------------------------------------------
# Param preparation (BN fold + transpose + pad + cast), hoisted out of per-call path
# ----------------------------------------------------------------------------
def _prepare_params(params, use_batch_norm, matmul_dtype):
    w1 = params["w1"].astype(jnp.float32)   # [D, H]
    b1 = params["b1"].astype(jnp.float32)
    w2 = params["w2"].astype(jnp.float32)   # [H, O]
    b2 = params["b2"].astype(jnp.float32)

    if use_batch_norm:
        eps = 1e-5
        scale = params["bn_gamma"] / jnp.sqrt(params["bn_var"] + eps)
        shift = params["bn_beta"] - params["bn_mean"] * scale
        # Fold eval-mode BatchNorm1d into the first linear (one-time transform).
        w1 = w1 * scale[None, :]
        b1 = b1 * scale + shift

    D, H = w1.shape
    O = w2.shape[1]
    # Sublane-only padding (16 covers bf16 packing and f32's 8).
    Dp, Hp, Op = _round_up(D, 16), _round_up(H, 16), _round_up(O, 16)

    # Zero padding: padded D rows of xT meet zero rows/cols of W1^T; padded H rows get
    # bias 0 -> ReLU(0)=0 -> multiply zero cols of W2^T; padded O rows are sliced off.
    w1T = jnp.pad(w1.T.astype(matmul_dtype), ((0, Hp - H), (0, Dp - D)))   # [Hp, Dp]
    w2T = jnp.pad(w2.T.astype(matmul_dtype), ((0, Op - O), (0, Hp - H)))   # [Op, Hp]
    b1c = jnp.pad(b1, (0, Hp - H)).reshape(Hp, 1)
    b2c = jnp.pad(b2, (0, Op - O)).reshape(Op, 1)
    return dict(w1T=w1T, b1=b1c, w2T=w2T, b2=b2c, n_out=O)


# ----------------------------------------------------------------------------
# Wrapper: batch-tiled pallas_call (transposed layout)
# ----------------------------------------------------------------------------
@functools.partial(jax.jit, static_argnames=("n_out", "matmul_dtype"))
def fcnet_core(x, w1T, b1, w2T, b2, n_out, matmul_dtype=jnp.bfloat16):
    """fc -> (folded) bn -> relu -> output on [B, D_in] input via one Pallas call."""
    Hp, Dp = w1T.shape
    Op = w2T.shape[0]
    B, D = x.shape

    mm_bytes = jnp.dtype(matmul_dtype).itemsize
    out_dtype = jnp.float32 if jnp.dtype(matmul_dtype) == jnp.float32 else jnp.bfloat16
    out_bytes = jnp.dtype(out_dtype).itemsize

    budget = _vmem_budget()
    TB = _pick_batch_tile(Dp, Hp, Op, mm_bytes, out_bytes, budget)

    Bp = _round_up(B, 128)                 # batch lives on the lane axis
    if Bp > TB:
        Bp = _round_up(Bp, TB)
    elif Bp >= 256:
        # Keep grid >= 2 so v7x's two TensorCores both get work on the "parallel" axis.
        TB = _round_up(Bp // 2, 128)
        Bp = _round_up(Bp, TB)
    else:
        TB = Bp                            # tiny batch: single tile (grid of 1)

    # Transpose + cast + pad x in one XLA fusion (much less padded data than before:
    # D pads 41->48 sublanes instead of 41->128 lanes).
    xT = jnp.pad(x.T.astype(matmul_dtype), ((0, Dp - D), (0, Bp - B)))

    precision = (jax.lax.Precision.HIGHEST if out_dtype == jnp.float32
                 else jax.lax.Precision.DEFAULT)
    kernel = functools.partial(_fcnet_kernel, precision=precision)

    flops = 2 * Bp * (Dp * Hp + Hp * Op)
    bytes_accessed = (Dp * Bp * mm_bytes                   # xT in
                      + (Hp * Dp + Op * Hp) * mm_bytes     # weights
                      + (Hp + Op) * 4                      # biases
                      + Op * Bp * out_bytes)               # out

    outT = pl.pallas_call(
        kernel,
        out_shape=jax.ShapeDtypeStruct((Op, Bp), out_dtype),
        grid_spec=pltpu.PrefetchScalarGridSpec(
            num_scalar_prefetch=0,
            grid=(Bp // TB,),
            in_specs=[
                pl.BlockSpec((Dp, TB), lambda i: (0, i)),   # xT: streamed batch tiles
                pl.BlockSpec((Hp, Dp), lambda i: (0, 0)),   # w1T: VMEM-resident
                pl.BlockSpec((Hp, 1), lambda i: (0, 0)),    # b1
                pl.BlockSpec((Op, Hp), lambda i: (0, 0)),   # w2T
                pl.BlockSpec((Op, 1), lambda i: (0, 0)),    # b2
            ],
            out_specs=pl.BlockSpec((Op, TB), lambda i: (0, i)),
        ),
        compiler_params=pltpu.CompilerParams(
            dimension_semantics=("parallel",),
            vmem_limit_bytes=int(budget)),        # same budget the tile was sized against
        cost_estimate=pl.CostEstimate(flops=flops, transcendentals=0,
                                      bytes_accessed=bytes_accessed),
    )(xT, w1T, b1, w2T, b2)

    # slice off padding, back to [B, O] f32
    return outT[:n_out, :B].T.astype(jnp.float32)


# ----------------------------------------------------------------------------
# FCNetwork wrapper (parameter init + forward_ts / forward_sensor glue)
# ----------------------------------------------------------------------------
class FCNetworkPallas:
    def __init__(self, input_size, hidden_size, output_size,
                 use_batch_norm=True, gesture_type_embedding_dim=8,
                 applied_data_list=("hold_time", "inter_time", "distance",
                                    "speed"),
                 data_type="touchscreen", *, key):
        self.use_batch_norm = use_batch_norm
        self.apply_data_list = applied_data_list
        self.data_type = data_type
        self.output_size = output_size

        k = jax.random.split(key, 6)

        # PyTorch-Linear-style uniform init U(-1/sqrt(fan_in), +1/sqrt(fan_in));
        # weights stored transposed vs PyTorch: [in_features, out_features].
        def lin_init(kw, kb, fan_in, fan_out):
            bound = 1.0 / jnp.sqrt(fan_in)
            w = jax.random.uniform(kw, (fan_in, fan_out), jnp.float32,
                                   -bound, bound)
            b = jax.random.uniform(kb, (fan_out,), jnp.float32, -bound, bound)
            return w, b

        w1, b1 = lin_init(k[0], k[1], input_size, hidden_size)
        w2, b2 = lin_init(k[2], k[3], hidden_size, output_size)
        emb = jax.random.normal(k[4], (14, gesture_type_embedding_dim),
                                jnp.float32)
        # nontrivial (but deterministic) BatchNorm running stats / affine params
        bn_mean = 0.1 * jax.random.normal(k[5], (hidden_size,), jnp.float32)
        bn_var = jnp.ones((hidden_size,), jnp.float32) * 1.5
        bn_gamma = jnp.ones((hidden_size,), jnp.float32)
        bn_beta = jnp.zeros((hidden_size,), jnp.float32)

        self.params = dict(w1=w1, b1=b1, w2=w2, b2=b2,
                           bn_gamma=bn_gamma, bn_beta=bn_beta,
                           bn_mean=bn_mean, bn_var=bn_var)
        self.embedding = emb
        self._prepared = {}   # per-matmul-dtype cache of folded/padded/cast params

    def _get_prepared(self, matmul_dtype):
        key = jnp.dtype(matmul_dtype).name
        if key not in self._prepared:
            self._prepared[key] = _prepare_params(self.params,
                                                  self.use_batch_norm,
                                                  matmul_dtype)
        return self._prepared[key]

    # ---- forward paths ------------------------------------------------------
    def forward(self, sensor_data, ts_data, total_time, gesture_type,
                matmul_dtype=jnp.bfloat16):
        if self.data_type == "sensor":
            return self.forward_sensor(sensor_data, matmul_dtype=matmul_dtype)
        elif self.data_type == "touchscreen":
            return self.forward_ts(ts_data, total_time, gesture_type,
                                   matmul_dtype=matmul_dtype)

    def forward_sensor(self, sensor_data, matmul_dtype=jnp.bfloat16):
        p = self._get_prepared(matmul_dtype)
        return fcnet_core(sensor_data, p["w1T"], p["b1"], p["w2T"], p["b2"],
                          n_out=self.output_size, matmul_dtype=matmul_dtype)

    def forward_ts(self, ts_data, total_time, gesture_type,
                   matmul_dtype=jnp.bfloat16):
        hold_time, inter_time, distance, speed = ts_data
        named = dict(hold_time=hold_time, inter_time=inter_time,
                     distance=distance, speed=speed)
        # Fixed (hold_time, inter_time, distance, speed) order filtered by membership:
        # matches the reference's locals()-insertion-order behavior.
        applied = [named[n][..., None] for n in
                   ("hold_time", "inter_time", "distance", "speed")
                   if n in self.apply_data_list]
        concat = jnp.concatenate(applied, axis=-1)
        flat = concat.reshape(concat.shape[0], -1)                    # [B, S*n_feats]
        gesture_emb = jnp.take(self.embedding, gesture_type, axis=0)  # [B, E]
        x = jnp.concatenate((flat, total_time, gesture_emb), axis=-1)
        p = self._get_prepared(matmul_dtype)
        return fcnet_core(x, p["w1T"], p["b1"], p["w2T"], p["b2"],
                          n_out=self.output_size, matmul_dtype=matmul_dtype)


# ----------------------------------------------------------------------------
# Pure-JAX reference for correctness check (unfolded BN, f32)
# ----------------------------------------------------------------------------
def _ref_core(x, params, use_batch_norm=True):
    eps = 1e-5
    h = x @ params["w1"] + params["b1"]
    if use_batch_norm:
        h = (h - params["bn_mean"]) / jnp.sqrt(params["bn_var"] + eps)
        h = h * params["bn_gamma"] + params["bn_beta"]
    h = jnp.maximum(h, 0.0)
    return h @ params["w2"] + params["b2"]


# ----------------------------------------------------------------------------
if __name__ == "__main__":
    key = jax.random.PRNGKey(0)
    k_model, k_ht, k_it, k_d, k_s, k_tt, k_g = jax.random.split(key, 7)

    # small shapes: batch=8, seq=8 touchscreen events, 4 features each,
    # total_time dim=1, gesture embedding dim=8
    B, S, E = 8, 8, 8
    input_size = S * 4 + 1 + E        # 41
    hidden_size = 32
    output_size = 16

    model = FCNetworkPallas(input_size, hidden_size, output_size,
                            use_batch_norm=True,
                            gesture_type_embedding_dim=E,
                            data_type="touchscreen",
                            key=k_model)

    hold_time = jax.random.normal(k_ht, (B, S), jnp.float32)
    inter_time = jax.random.normal(k_it, (B, S), jnp.float32)
    distance = jax.random.normal(k_d, (B, S), jnp.float32)
    speed = jax.random.normal(k_s, (B, S), jnp.float32)
    total_time = jax.random.normal(k_tt, (B, 1), jnp.float32)
    gesture_type = jax.random.randint(k_g, (B,), 0, 14, jnp.int32)

    ts = (hold_time, inter_time, distance, speed)

    # pure-JAX reference input / output
    concat = jnp.stack([hold_time, inter_time, distance, speed], axis=-1)
    flat = concat.reshape(B, -1)
    gemb = jnp.take(model.embedding, gesture_type, axis=0)
    x_ref = jnp.concatenate((flat, total_time, gemb), axis=-1)
    ref = _ref_core(x_ref, model.params, use_batch_norm=True)

    # 1) bf16-matmul / f32-accumulate / bf16-writeback path (the performance path)
    out_bf16 = model.forward(sensor_data=None, ts_data=ts,
                             total_time=total_time, gesture_type=gesture_type,
                             matmul_dtype=jnp.bfloat16)
    out_bf16 = jax.block_until_ready(out_bf16)
    assert out_bf16.shape == (B, output_size), out_bf16.shape
    assert jnp.allclose(out_bf16, ref, atol=2e-2, rtol=2e-2), \
        float(jnp.max(jnp.abs(out_bf16 - ref)))

    # 2) f32 path (tight-tolerance correctness check of the fused kernel itself)
    out_f32 = model.forward(sensor_data=None, ts_data=ts,
                            total_time=total_time, gesture_type=gesture_type,
                            matmul_dtype=jnp.float32)
    out_f32 = jax.block_until_ready(out_f32)
    assert out_f32.shape == (B, output_size), out_f32.shape
    assert jnp.allclose(out_f32, ref, atol=1e-4, rtol=1e-4), \
        float(jnp.max(jnp.abs(out_f32 - ref)))

    print("KERNEL_OK")
</pallas_src>

<mosaic_0001>
module attributes {stable_mosaic.version = 11 : i64} {
  func.func @_fcnet_kernel(%arg0: i32, %arg1: memref<48x128xbf16, #tpu.memory_space<vmem>>, %arg2: memref<32x48xbf16, #tpu.memory_space<vmem>>, %arg3: memref<32x1xf32, #tpu.memory_space<vmem>>, %arg4: memref<16x32xbf16, #tpu.memory_space<vmem>>, %arg5: memref<16x1xf32, #tpu.memory_space<vmem>>, %arg6: memref<16x128xbf16, #tpu.memory_space<vmem>>) attributes {dimension_semantics = [#tpu.dimension_semantics<parallel>], iteration_bounds = array<i64: 1>, scalar_prefetch = 0 : i64, scratch_operands = 0 : i64, tpu.core_type = #tpu.core_type<tc>, window_params = [{transform_indices = @transform_0, window_bounds = array<i64: 48, 128>}, {pipeline_mode = #tpu.pipeline_mode<synchronous>, transform_indices = @transform_1, window_bounds = array<i64: 32, 48>}, {pipeline_mode = #tpu.pipeline_mode<synchronous>, transform_indices = @transform_2, window_bounds = array<i64: 32, 1>}, {pipeline_mode = #tpu.pipeline_mode<synchronous>, transform_indices = @transform_3, window_bounds = array<i64: 16, 32>}, {pipeline_mode = #tpu.pipeline_mode<synchronous>, transform_indices = @transform_4, window_bounds = array<i64: 16, 1>}, {transform_indices = @transform_5, window_bounds = array<i64: 16, 128>}]} {
    %c0 = arith.constant 0 : index
    %c0_0 = arith.constant 0 : index
    %0 = vector.load %arg2[%c0, %c0_0] : memref<32x48xbf16, #tpu.memory_space<vmem>>, vector<32x48xbf16>
    %c0_1 = arith.constant 0 : index
    %c0_2 = arith.constant 0 : index
    %1 = vector.load %arg1[%c0_1, %c0_2] : memref<48x128xbf16, #tpu.memory_space<vmem>>, vector<48x128xbf16>
    %cst = arith.constant dense<0.000000e+00> : vector<32x128xf32>
    %2 = tpu.matmul %0, %1, %cst {dimension_numbers = #tpu.dot_dimension_numbers<[1], [0], [0], [1], [0, 0, 1, 1], [], []>} : vector<32x48xbf16>, vector<48x128xbf16>, vector<32x128xf32> -> vector<32x128xf32>
    %c0_3 = arith.constant 0 : index
    %c0_4 = arith.constant 0 : index
    %3 = vector.load %arg3[%c0_3, %c0_4] : memref<32x1xf32, #tpu.memory_space<vmem>>, vector<32x1xf32>
    %4 = vector.broadcast %3 : vector<32x1xf32> to vector<32x128xf32>
    %5 = arith.addf %2, %4 : vector<32x128xf32>
    %cst_5 = arith.constant 0.000000e+00 : f32
    %6 = vector.broadcast %cst_5 : f32 to vector<32x128xf32>
    %7 = arith.maximumf %5, %6 : vector<32x128xf32>
    %8 = arith.truncf %7 : vector<32x128xf32> to vector<32x128xbf16>
    %c0_6 = arith.constant 0 : index
    %c0_7 = arith.constant 0 : index
    %9 = vector.load %arg4[%c0_6, %c0_7] : memref<16x32xbf16, #tpu.memory_space<vmem>>, vector<16x32xbf16>
    %cst_8 = arith.constant dense<0.000000e+00> : vector<16x128xf32>
    %10 = tpu.matmul %9, %8, %cst_8 {dimension_numbers = #tpu.dot_dimension_numbers<[1], [0], [0], [1], [0, 0, 1, 1], [], []>} : vector<16x32xbf16>, vector<32x128xbf16>, vector<16x128xf32> -> vector<16x128xf32>
    %c0_9 = arith.constant 0 : index
    %c0_10 = arith.constant 0 : index
    %11 = vector.load %arg5[%c0_9, %c0_10] : memref<16x1xf32, #tpu.memory_space<vmem>>, vector<16x1xf32>
    %12 = vector.broadcast %11 : vector<16x1xf32> to vector<16x128xf32>
    %13 = arith.addf %10, %12 : vector<16x128xf32>
    %14 = arith.truncf %13 : vector<16x128xf32> to vector<16x128xbf16>
    %c0_11 = arith.constant 0 : index
    %c0_12 = arith.constant 0 : index
    %15 = vector.load %arg6[%c0_11, %c0_12] : memref<16x128xbf16, #tpu.memory_space<vmem>>, vector<16x128xbf16>
    tpu.vector_store %arg6[%c0_11, %c0_12], %14 {strides = array<i32>} : memref<16x128xbf16, #tpu.memory_space<vmem>>, vector<16x128xbf16>,
    return
  }
  func.func @transform_0(%arg0: i32) -> (i32, i32) {
    %c0_i32 = arith.constant 0 : i32
    %c0_i32_0 = arith.constant 0 : i32
    return %c0_i32, %arg0 : i32, i32
  }
  func.func @transform_1(%arg0: i32) -> (i32, i32) {
    %c0_i32 = arith.constant 0 : i32
    %c0_i32_0 = arith.constant 0 : i32
    %c0_i32_1 = arith.constant 0 : i32
    return %c0_i32, %c0_i32_0 : i32, i32
  }
  func.func @transform_2(%arg0: i32) -> (i32, i32) {
    %c0_i32 = arith.constant 0 : i32
    %c0_i32_0 = arith.constant 0 : i32
    %c0_i32_1 = arith.constant 0 : i32
    return %c0_i32, %c0_i32_0 : i32, i32
  }
  func.func @transform_3(%arg0: i32) -> (i32, i32) {
    %c0_i32 = arith.constant 0 : i32
    %c0_i32_0 = arith.constant 0 : i32
    %c0_i32_1 = arith.constant 0 : i32
    return %c0_i32, %c0_i32_0 : i32, i32
  }
  func.func @transform_4(%arg0: i32) -> (i32, i32) {
    %c0_i32 = arith.constant 0 : i32
    %c0_i32_0 = arith.constant 0 : i32
    %c0_i32_1 = arith.constant 0 : i32
    return %c0_i32, %c0_i32_0 : i32, i32
  }
  func.func @transform_5(%arg0: i32) -> (i32, i32) {
    %c0_i32 = arith.constant 0 : i32
    %c0_i32_0 = arith.constant 0 : i32
    return %c0_i32, %arg0 : i32, i32
  }
}

</mosaic_0001>

<llo_original>
// kernel: fcnet_core.1
$region0: #{fcnet_core.1}
  #allocation0 [shape = 'u32[]', space=smem, size = 0x4, offset = 0x4, fixed_abs, tag = 'smem constant byte address 0x4 - core index']
  #allocation1 [shape = 'u32[144,128]{1,0:T(1,128)}', space=vmem, size = 0x12000, scoped, tag = 'internal scratch']
  %s0 = inlined_call_operand.vmem [shape: bf16[48,128], index: 0, kind: input, shape index: {}]
  %s1 = inlined_call_operand.vmem [shape: bf16[32,48], index: 1, kind: input, shape index: {}]
  %s2 = inlined_call_operand.vmem [shape: f32[32,1], index: 2, kind: input, shape index: {}]
  %s3 = inlined_call_operand.vmem [shape: bf16[16,32], index: 3, kind: input, shape index: {}]
  %s4 = inlined_call_operand.vmem [shape: f32[16,1], index: 4, kind: input, shape index: {}]
  %s5 = inlined_call_operand.vmem [shape: bf16[16,128], index: 5, kind: output, shape index: {}]
  %s6 = sld [smem:[#allocation0]]
  $region30: #{fcnet_core.1} parent=0
    _
  %s8 = ssub.s32 1, %s6
  %s9 = scalar_select 0, %s8, %s6
  // Predicated region
  $region2: #{fcnet_core.1} parent=0 // pred_check
    _
  $region3: #{fcnet_core.1} parent=0 // pred_check_branch
    %11 = sbr.rel (0) target = $region5
  $region4: #{fcnet_core.1} parent=0 // pred_region
    _
  $region5: #{fcnet_core.1} parent=0 // pred_fallthru
    _
  // Predicated region
  $region6: #{fcnet_core.1} parent=0 // pred_check
    _
  $region7: #{fcnet_core.1} parent=0 // pred_check_branch
    %13 = sbr.rel (0) target = $region9
  $region8: #{fcnet_core.1} parent=0 // pred_region
    _
  $region9: #{fcnet_core.1} parent=0 // pred_fallthru
    _
  // Predicated region
  $region10: #{fcnet_core.1} parent=0 // pred_check
    _
  $region11: #{fcnet_core.1} parent=0 // pred_check_branch
    %15 = sbr.rel (0) target = $region13
  $region12: #{fcnet_core.1} parent=0 // pred_region
    _
  $region13: #{fcnet_core.1} parent=0 // pred_fallthru
    _
  // Predicated region
  $region14: #{fcnet_core.1} parent=0 // pred_check
    _
  $region15: #{fcnet_core.1} parent=0 // pred_check_branch
    %17 = sbr.rel (0) target = $region17
  $region16: #{fcnet_core.1} parent=0 // pred_region
    _
  $region17: #{fcnet_core.1} parent=0 // pred_fallthru
    _
  // Predicated region
  $region18: #{fcnet_core.1} parent=0 // pred_check
    _
  $region19: #{fcnet_core.1} parent=0 // pred_check_branch
    %19 = sbr.rel (0) target = $region21
  $region20: #{fcnet_core.1} parent=0 // pred_region
    _
  $region21: #{fcnet_core.1} parent=0 // pred_fallthru
    _
  %v21 = vld [vmem:[%s1] sm:$0xf]
  %v22 = vld [vmem:[%s1 + $0x4] sm:$0xf]
  %v23 = vld [vmem:[%s1 + $0x8] sm:$0xf]
  %v24 = vld [vmem:[%s1 + $0xc] sm:$0xf]
  %v25 = vld [vmem:[%s0] sm:$0xf]
  %v26 = vld [vmem:[%s0 + $0x4] sm:$0xf]
  %v27 = vld [vmem:[%s0 + $0x8] sm:$0xf]
  %v28 = vld [vmem:[%s0 + $0xc] sm:$0xf]
  %v29 = vld [vmem:[%s0 + $0x10] sm:$0xf]
  %v30 = vld [vmem:[%s0 + $0x14] sm:$0xf]
  %v31 = vld [vmem:[%s2] sm:$0xff]
  %v32 = vld [vmem:[%s2 + $0x8] sm:$0xff]
  %v33 = vld [vmem:[%s2 + $0x10] sm:$0xff]
  %v34 = vld [vmem:[%s2 + $0x18] sm:$0xff]
  %36 = vset.pattern.permute.xlu0 0
  %37 = vperm.xlu0 %36, %v31
  %v38 = vpop.permute.xlu0 %37
  %41 = vset.pattern.permute.xlu0 0
  %42 = vperm.xlu0 %41, %v32
  %v43 = vpop.permute.xlu0 %42
  %46 = vset.pattern.permute.xlu0 0
  %47 = vperm.xlu0 %46, %v33
  %v48 = vpop.permute.xlu0 %47
  %51 = vset.pattern.permute.xlu0 0
  %52 = vperm.xlu0 %51, %v34
  %v53 = vpop.permute.xlu0 %52
  %v59 = vunpack.c.l.b16 %v21
  %v60 = vunpack.c.l.b16 %v22
  %v61 = vunpack.c.l.b16 %v23
  %v62 = vunpack.c.l.b16 %v24
  %v63 = vpack.c.b16 %v60, %v59
  %v64 = vpack.c.b16 %v62, %v61
  %v71 = vunpack.c.l.b16 %v25
  %v72 = vunpack.c.l.b16 %v26
  %v73 = vunpack.c.l.b16 %v27
  %v74 = vunpack.c.l.b16 %v28
  %v75 = vunpack.c.l.b16 %v29
  %v76 = vunpack.c.l.b16 %v30
  %v77 = vpack.c.b16 %v72, %v71
  %v78 = vpack.c.b16 %v74, %v73
  %v79 = vpack.c.b16 %v76, %v75
  %vm83 = vcmask 392192
  %v85 = vsel %vm83, %v63, 0
  %v88 = vsel %vm83, %v64, 0
  %90 = vmatprep.subr.bf16.mxu0 0
  %91 = vmatpush1.bf16.msra.mxu0 0
  %92 = vmatprep.subr.bf16.mxu0 0
  %93 = vmatpush1.bf16.msra.mxu0 0
  %94 = vmatprep.subr.bf16.mxu0 0
  %95 = vmatpush1.bf16.msra.mxu0 0
  %96 = vmatprep.subr.bf16.mxu0 0
  %97 = vmatpush1.bf16.msra.mxu0 0
  %98 = vmatprep.subr.bf16.mxu0 0
  %99 = vmatpush1.bf16.msra.mxu0 0
  %100 = vmatprep.subr.bf16.mxu0 0
  %101 = vmatpush1.bf16.msra.mxu0 %v79
  %102 = vmatprep.subr.bf16.mxu0 0
  %103 = vmatpush1.bf16.msra.mxu0 %v78
  %104 = vmatprep.subr.bf16.mxu0 0
  %105 = vmatpush1.bf16.msra.mxu0 %v77
  %106 = vmatprep.subr.bf16.mxu0 0
  %107 = vmatpush2.bf16.msra.mxu0 0
  %108 = vmatprep.subr.bf16.mxu0 0
  %109 = vmatpush2.bf16.msra.mxu0 0
  %110 = vmatprep.subr.bf16.mxu0 0
  %111 = vmatpush2.bf16.msra.mxu0 0
  %112 = vmatprep.subr.bf16.mxu0 0
  %113 = vmatpush2.bf16.msra.mxu0 0
  %114 = vmatprep.subr.bf16.mxu0 0
  %115 = vmatpush2.bf16.msra.mxu0 0
  %116 = vmatprep.subr.bf16.mxu0 0
  %117 = vmatpush2.bf16.msra.mxu0 0
  %118 = vmatprep.subr.bf16.mxu0 0
  %119 = vmatpush2.bf16.msra.mxu0 0
  %120 = vmatprep.subr.bf16.mxu0 0
  %121 = vmatpush2.bf16.msra.mxu0 0
  %122 = vmatprep.mubr.bf16.mxu0 0
  %123 = vmatmul.mubr.bf16.gmra.mxu0 %v85
  %v124 = vpop.f32.mrf.mxu0
  %v125 = vadd.f32 %v38, %v124
  %v126 = vpop.f32.mrf.mxu0
  %v127 = vpop.f32.mrf.mxu0
  %v128 = vadd.f32 %v43, %v127
  %v129 = vpop.f32.mrf.mxu0
  %130 = vmatprep.mubr.bf16.mxu0 0
  %131 = vmatmul.mubr.bf16.gmra.mxu0 %v88
  %v132 = vpop.f32.mrf.mxu0
  %v133 = vadd.f32 %v48, %v132
  %v134 = vpop.f32.mrf.mxu0
  %v135 = vpop.f32.mrf.mxu0
  %v136 = vadd.f32 %v53, %v135
  %v137 = vpop.f32.mrf.mxu0
  %138 = vdwg.mxu0
  %v139 = vmax.f32 %v125, 0.0
  %v140 = vmax.f32 %v128, 0.0
  %v141 = vmax.f32 %v133, 0.0
  %v142 = vmax.f32 %v136, 0.0
  %v143 = vpack.c.bf16 %v140, %v139
  %v144 = vpack.c.bf16 %v142, %v141
  %v145 = vld [vmem:[%s3] sm:$0xf]
  %v146 = vld [vmem:[%s3 + $0x4] sm:$0xf]
  %v147 = vld [vmem:[%s4] sm:$0xff]
  %v148 = vld [vmem:[%s4 + $0x8] sm:$0xff]
  %150 = vset.pattern.permute.xlu0 0
  %151 = vperm.xlu0 %150, %v147
  %v152 = vpop.permute.xlu0 %151
  %155 = vset.pattern.permute.xlu0 0
  %156 = vperm.xlu0 %155, %v148
  %v157 = vpop.permute.xlu0 %156
  %v161 = vunpack.c.l.b16 %v145
  %v162 = vunpack.c.l.b16 %v146
  %v163 = vpack.c.b16 %v162, %v161
  %vm164 = vcmask 261120
  %v166 = vsel %vm164, %v163, 0
  %168 = vmatprep.subr.bf16.mxu0 0
  %169 = vmatpush1.bf16.msra.mxu0 0
  %170 = vmatprep.subr.bf16.mxu0 0
  %171 = vmatpush1.bf16.msra.mxu0 0
  %172 = vmatprep.subr.bf16.mxu0 0
  %173 = vmatpush1.bf16.msra.mxu0 0
  %174 = vmatprep.subr.bf16.mxu0 0
  %175 = vmatpush1.bf16.msra.mxu0 0
  %176 = vmatprep.subr.bf16.mxu0 0
  %177 = vmatpush1.bf16.msra.mxu0 0
  %178 = vmatprep.subr.bf16.mxu0 0
  %179 = vmatpush1.bf16.msra.mxu0 0
  %180 = vmatprep.subr.bf16.mxu0 0
  %181 = vmatpush1.bf16.msra.mxu0 %v144
  %182 = vmatprep.subr.bf16.mxu0 0
  %183 = vmatpush1.bf16.msra.mxu0 %v143
  %184 = vmatprep.subr.bf16.mxu0 0
  %185 = vmatpush2.bf16.msra.mxu0 0
  %186 = vmatprep.subr.bf16.mxu0 0
  %187 = vmatpush2.bf16.msra.mxu0 0
  %188 = vmatprep.subr.bf16.mxu0 0
  %189 = vmatpush2.bf16.msra.mxu0 0
  %190 = vmatprep.subr.bf16.mxu0 0
  %191 = vmatpush2.bf16.msra.mxu0 0
  %192 = vmatprep.subr.bf16.mxu0 0
  %193 = vmatpush2.bf16.msra.mxu0 0
  %194 = vmatprep.subr.bf16.mxu0 0
  %195 = vmatpush2.bf16.msra.mxu0 0
  %196 = vmatprep.subr.bf16.mxu0 0
  %197 = vmatpush2.bf16.msra.mxu0 0
  %198 = vmatprep.subr.bf16.mxu0 0
  %199 = vmatpush2.bf16.msra.mxu0 0
  %200 = vmatprep.mubr.bf16.mxu0 0
  %201 = vmatmul.mubr.bf16.gmra.mxu0 %v166
  %v202 = vpop.f32.mrf.mxu0
  %v203 = vadd.f32 %v152, %v202
  %v204 = vpop.f32.mrf.mxu0
  %v205 = vpop.f32.mrf.mxu0
  %v206 = vadd.f32 %v157, %v205
  %v207 = vpop.f32.mrf.mxu0
  %208 = vdwg.mxu0
  %v209 = vpack.c.bf16 %v206, %v203
  %v211 = vunpack.c.l.b16 %v209
  %v212 = vunpack.c.h.b16 %v209
  %v213 = vpack.c.b16 %v211, %v211
  %v214 = vpack.c.b16 %v212, %v212
  %217 = vst [vmem:[%s5] sm:$0xf] %v213
  %218 = vst [vmem:[%s5 + $0x4] sm:$0xf] %v214
  // Predicated region
  $region22: #{fcnet_core.1} parent=0 // pred_check
    _
  $region23: #{fcnet_core.1} parent=0 // pred_check_branch
    %220 = sbr.rel (0) target = $region25
  $region24: #{fcnet_core.1} parent=0 // pred_region
    _
  $region25: #{fcnet_core.1} parent=0 // pred_fallthru
    _
  // Predicated region
  $region26: #{fcnet_core.1} parent=0 // pred_check
    _
  $region27: #{fcnet_core.1} parent=0 // pred_check_branch
    %222 = sbr.rel (0) target = $region29
  $region28: #{fcnet_core.1} parent=0 // pred_region
    _
  $region29: #{fcnet_core.1} parent=0 // pred_fallthru
    _

</llo_original>
